<compile_context>
chip_gen: v7x
topology: tpu7x:2x2x1
jax: 0.10.0
libtpu: 0.0.40
codegen_flags: <defaults>
</compile_context>

<pallas_src>
import functools

import jax
import jax.numpy as jnp
from jax.experimental import pallas as pl
from jax.experimental.pallas import tpu as pltpu

_VMEM_LIMIT = 48 * 1024 * 1024   # explicit; leaves headroom on v7x's 64 MiB


def _round_up(v, m):
    return ((v + m - 1) // m) * m


def _pick_tile(dim, target, quantum=128):
    """Largest tile <= target dividing dim, preferring multiples of `quantum`.
    Avoids any per-call padding of the operands (review item)."""
    if dim <= target:
        return dim
    t = (target // quantum) * quantum
    while t >= quantum:
        if dim % t == 0:
            return t
        t -= quantum
    for t in range(target, 0, -1):
        if dim % t == 0:
            return t
    return dim


# ---------------------------------------------------------------------------
# Kernel 1: M/N/K tiled matmul, f32 accumulation in VMEM scratch, f32 bias add.
# ---------------------------------------------------------------------------
def _matmul_bias_kernel(x_ref, w_ref, b_ref, o_ref, acc_ref):
    @pl.when(pl.program_id(2) == 0)
    def _():
        acc_ref[...] = jnp.zeros_like(acc_ref)

    acc_ref[...] += jnp.dot(x_ref[...], w_ref[...],
                            preferred_element_type=jnp.float32)

    @pl.when(pl.program_id(2) == pl.num_programs(2) - 1)
    def _():
        o_ref[...] = (acc_ref[...] + b_ref[...]).astype(o_ref.dtype)


def pallas_matmul_bias(x, w, b_row, *, tm=1024, tn=512, tk=512):
    """y = x @ w + b_row.  x:(M,K), w:(K,Np) with Np % 128 == 0 (pre-padded,
    pre-cast at construction), b_row:(1,Np) float32.  Returns (M,Np) in x.dtype.
    Note: on v5e prefer tm<=512 (narrow store slot)."""
    M, K = x.shape
    Kw, Np = w.shape
    assert K == Kw and Np % 128 == 0 and b_row.shape == (1, Np)
    assert x.dtype == w.dtype, "weight must be pre-cast at construction"

    tm = min(tm, M)                 # ragged M handled by masked stores
    tn = _pick_tile(Np, tn, 128)    # largest 128-multiple divisor <= target
    tk = _pick_tile(K, tk, 128)     # divisor of K -> no per-call K padding

    grid = (pl.cdiv(M, tm), Np // tn, K // tk)
    return pl.pallas_call(
        _matmul_bias_kernel,
        out_shape=jax.ShapeDtypeStruct((M, Np), x.dtype),
        grid_spec=pltpu.PrefetchScalarGridSpec(
            num_scalar_prefetch=0,
            grid=grid,
            in_specs=[
                pl.BlockSpec((tm, tk), lambda i, j, k: (i, k)),
                pl.BlockSpec((tk, tn), lambda i, j, k: (k, j)),
                pl.BlockSpec((1, tn), lambda i, j, k: (0, j)),   # f32 bias row
            ],
            out_specs=pl.BlockSpec((tm, tn), lambda i, j, k: (i, j)),
            scratch_shapes=[pltpu.VMEM((tm, tn), jnp.float32)],
        ),
        compiler_params=pltpu.CompilerParams(
            dimension_semantics=("parallel", "parallel", "arbitrary"),
            vmem_limit_bytes=_VMEM_LIMIT,
        ),
    )(x, w, b_row)


# ---------------------------------------------------------------------------
# Kernel 2: direct conv2d via im2col-in-VMEM, one MXU matmul per row band.
# ---------------------------------------------------------------------------
def _conv_im2col_kernel(x_ref, w_ref, b_ref, o_ref, slab_ref, *,
                        kh, kw, stride, bh, wo):
    # x_ref   : (1, hp, wp, c)    padded NHWC image (resident across bands)
    # w_ref   : (kh*kw*c, opad)   weight slab, opad % 128 == 0
    # b_ref   : (1, opad)         float32
    # o_ref   : (1, bh*wo, opad)  output row band
    # slab_ref: (bh*wo, kh*kw*c)  VMEM im2col slab
    c = x_ref.shape[-1]
    h0 = pl.multiple_of(pl.program_id(1) * (bh * stride), bh * stride)
    for i in range(kh):                      # static unroll: kh*kw slab writes
        for j in range(kw):
            if stride == 1:
                win = x_ref[0, pl.ds(h0 + i, bh), j:j + wo, :]
            else:
                # stride>1 via strided pl.ds (no Python strided slicing / XLU
                # heavy relayout of an oversized window).
                win = x_ref[0, pl.ds(h0 + i, bh, stride=stride),
                            pl.ds(j, wo, stride=stride), :]
            col = (i * kw + j) * c
            slab_ref[:, col:col + c] = win.reshape(bh * wo, c)
    # Single MXU matmul, contraction K = kh*kw*c; accumulate inside the MXU.
    o_ref[0] = (jnp.dot(slab_ref[...], w_ref[...],
                        preferred_element_type=jnp.float32)
                + b_ref[...]).astype(o_ref.dtype)


def _pick_row_band(ho, wo, target_px=4096):
    """Largest divisor bh of ho with bh*wo <= target_px and (bh*wo) % 8 == 0
    (sublane alignment of the band); falls back to the full output height."""
    cap = min(ho, max(1, target_px // max(wo, 1)))
    for bh in range(cap, 0, -1):
        if ho % bh == 0 and (bh == ho or (bh * wo) % 8 == 0):
            return bh
    return ho


def conv2d_forward(x, w_mat, b_row, out_ch, ksize, stride, padding,
                   row_band=None):
    """PyTorch nn.Conv2d semantics (NCHW in/out).
    w_mat: (kh*kw*C, Opad) pre-laid-out weight, b_row: (1, Opad) float32."""
    n, c, h, w = x.shape
    kh = kw = ksize
    ho = (h + 2 * padding - kh) // stride + 1
    wo = (w + 2 * padding - kw) // stride + 1
    hp, wp = h + 2 * padding, w + 2 * padding
    kkc, opad = w_mat.shape

    # TODO(synk): in a real network keep activations NHWC / channel-padded
    #             across layers and zero-fill the halo inside the kernel; the
    #             per-call layout conversion below is kept only because the
    #             module's external interface is NCHW.
    xp = jnp.pad(x, ((0, 0), (0, 0), (padding, padding), (padding, padding)))
    x_nhwc = jnp.transpose(xp, (0, 2, 3, 1))
    if x_nhwc.dtype != w_mat.dtype:
        x_nhwc = x_nhwc.astype(w_mat.dtype)

    if row_band is not None:
        bh = max(1, min(int(row_band), ho))
        if ho % bh or (bh != ho and (bh * wo) % 8):
            bh = _pick_row_band(ho, wo)
    else:
        bh = _pick_row_band(ho, wo)
    n_bands = ho // bh

    kernel = functools.partial(_conv_im2col_kernel, kh=kh, kw=kw,
                               stride=stride, bh=bh, wo=wo)
    y = pl.pallas_call(
        kernel,
        out_shape=jax.ShapeDtypeStruct((n, ho * wo, opad), x_nhwc.dtype),
        grid_spec=pltpu.PrefetchScalarGridSpec(
            num_scalar_prefetch=0,
            grid=(n, n_bands),
            in_specs=[
                # Whole padded image per batch element; index map ignores the
                # band axis, so it is NOT re-DMA'd across bands.
                # TODO(synk): for very large images on v7x (64 MiB VMEM), DMA a
                #             halo'd row band from pl.ANY instead of keeping the
                #             full image resident.
                pl.BlockSpec((1, hp, wp, c), lambda b, r: (b, 0, 0, 0)),
                pl.BlockSpec((kkc, opad), lambda b, r: (0, 0)),
                pl.BlockSpec((1, opad), lambda b, r: (0, 0)),
            ],
            out_specs=pl.BlockSpec((1, bh * wo, opad), lambda b, r: (b, r, 0)),
            scratch_shapes=[pltpu.VMEM((bh * wo, kkc), x_nhwc.dtype)],
        ),
        compiler_params=pltpu.CompilerParams(
            dimension_semantics=("parallel", "parallel"),
            vmem_limit_bytes=_VMEM_LIMIT,
        ),
    )(x_nhwc, w_mat, b_row)

    y = y[:, :, :out_ch]                                    # drop lane padding
    return y.reshape(n, ho, wo, out_ch).transpose(0, 3, 1, 2)   # NHWC -> NCHW


def linear_forward(x, w_kn, b_row, out_features):
    """PyTorch nn.Linear semantics.  w_kn: (in, Npad) pre-transposed, padded,
    pre-cast at construction."""
    lead = x.shape[:-1]
    x2 = x.reshape(-1, x.shape[-1])
    if x2.dtype != w_kn.dtype:
        x2 = x2.astype(w_kn.dtype)
    y = pallas_matmul_bias(x2, w_kn, b_row)
    return y[:, :out_features].reshape(*lead, out_features)


# ---------------------------------------------------------------------------
# DynamicLayer equivalent (digital path only).
# TODO(synk): analog_layer (aihwkit AnalogConv2d/AnalogLinear RPU simulation)
#             and toggle()'s analog<->digital weight round-trip have no Pallas
#             equivalent -- only the digital forward is implemented.
# ---------------------------------------------------------------------------
class DynamicLayerPallas:
    def __init__(self, layer_type, *args, key=None,
                 compute_dtype=jnp.float32, row_band=None, **kwargs):
        self.layer_type = layer_type
        key = jax.random.PRNGKey(0) if key is None else key
        kw_, kb_ = jax.random.split(key)
        # compute_dtype=jnp.bfloat16 feeds the MXU bf16 operands on v6e/v7x
        # (f32 VMEM accumulator + f32 bias are kept either way).
        self.compute_dtype = compute_dtype
        if layer_type == "conv":
            in_ch, out_ch, ksize = args[0], args[1], args[2]
            self.stride = kwargs.get("stride", 1)
            self.padding = kwargs.get("padding", 0)
            self.out_ch, self.ksize = out_ch, ksize
            self.row_band = row_band
            fan_in = in_ch * ksize * ksize
            bound = 1.0 / (fan_in ** 0.5)
            self.weight = jax.random.uniform(
                kw_, (out_ch, in_ch, ksize, ksize), jnp.float32, -bound, bound)
            self.bias = jax.random.uniform(
                kb_, (out_ch,), jnp.float32, -bound, bound)
            # One-time re-layout: (O,C,kh,kw) -> (kh*kw*C, Opad) so the whole
            # receptive field is a single MXU contraction; Opad % 128 == 0 for
            # lane-dense stores.  Dtype cast happens here, never per-call.
            o_pad = _round_up(out_ch, 128)
            w2 = jnp.transpose(self.weight, (2, 3, 1, 0)).reshape(
                ksize * ksize * in_ch, out_ch)
            self._w_mat = jnp.pad(
                w2, ((0, 0), (0, o_pad - out_ch))).astype(compute_dtype)
            self._b_row = jnp.pad(self.bias, (0, o_pad - out_ch)
                                  ).reshape(1, o_pad).astype(jnp.float32)
        elif layer_type == "linear":
            in_f, out_f = args[0], args[1]
            self.out_f = out_f
            bound = 1.0 / (in_f ** 0.5)
            self.weight = jax.random.uniform(
                kw_, (out_f, in_f), jnp.float32, -bound, bound)
            self.bias = jax.random.uniform(
                kb_, (out_f,), jnp.float32, -bound, bound)
            # One-time pre-transpose + lane padding + dtype cast: (out,in) ->
            # (in, Npad) with Npad % 128 == 0.
            n_pad = _round_up(out_f, 128)
            self._w_mat = jnp.pad(
                self.weight.T, ((0, 0), (0, n_pad - out_f))).astype(compute_dtype)
            self._b_row = jnp.pad(self.bias, (0, n_pad - out_f)
                                  ).reshape(1, n_pad).astype(jnp.float32)
        else:
            raise ValueError("Invalid layer_type. Use 'conv' or 'linear'.")
        self.is_analog = False  # forward always takes the digital (Pallas) path

    def __call__(self, x):
        if self.layer_type == "conv":
            return conv2d_forward(x, self._w_mat, self._b_row, self.out_ch,
                                  self.ksize, self.stride, self.padding,
                                  row_band=self.row_band)
        return linear_forward(x, self._w_mat, self._b_row, self.out_f)


# ---------------------------------------------------------------------------
if __name__ == "__main__":
    root = jax.random.PRNGKey(0)
    k_cx, k_lx, k_lx2, k_cp, k_lp, k_lp2 = jax.random.split(root, 6)

    # conv case: DynamicLayer('conv', 4, 8, 3, padding=1); row_band=4 forces
    # the multi-band path (4 output-row bands of 4 rows each).
    x_conv = jax.random.normal(k_cx, (2, 4, 16, 16), jnp.float32)
    conv_layer = DynamicLayerPallas("conv", 4, 8, 3, padding=1,
                                    key=k_cp, row_band=4)
    y_conv = jax.block_until_ready(conv_layer(x_conv))

    y_conv_ref = jax.lax.conv_general_dilated(
        x_conv, conv_layer.weight, window_strides=(1, 1),
        padding=((1, 1), (1, 1)),
        dimension_numbers=("NCHW", "OIHW", "NCHW"),
        precision=jax.lax.Precision.HIGHEST,
    ) + conv_layer.bias.reshape(1, -1, 1, 1)
    assert y_conv.shape == (2, 8, 16, 16)
    assert jnp.allclose(y_conv, y_conv_ref, atol=1e-4, rtol=1e-4)

    # linear case: DynamicLayer('linear', 32, 16) on a (batch, seq, hidden) input.
    x_lin = jax.random.normal(k_lx, (2, 8, 32), jnp.float32)
    lin_layer = DynamicLayerPallas("linear", 32, 16, key=k_lp)
    y_lin = jax.block_until_ready(lin_layer(x_lin))

    y_lin_ref = jnp.dot(x_lin, lin_layer.weight.T,
                        precision=jax.lax.Precision.HIGHEST) + lin_layer.bias
    assert y_lin.shape == (2, 8, 16)
    assert jnp.allclose(y_lin, y_lin_ref, atol=1e-4, rtol=1e-4)

    # larger linear to exercise the multi-step K accumulation path (tk=512, 2 steps).
    x_lin2 = jax.random.normal(k_lx2, (4, 1024), jnp.float32)
    lin_layer2 = DynamicLayerPallas("linear", 1024, 256, key=k_lp2)
    y_lin2 = jax.block_until_ready(lin_layer2(x_lin2))

    y_lin2_ref = jnp.dot(x_lin2, lin_layer2.weight.T,
                         precision=jax.lax.Precision.HIGHEST) + lin_layer2.bias
    assert y_lin2.shape == (4, 256)
    assert jnp.allclose(y_lin2, y_lin2_ref, atol=1e-4, rtol=1e-4)

    print("KERNEL_OK")
</pallas_src>

<mosaic_0001>
module attributes {stable_mosaic.version = 11 : i64} {
  func.func @_conv_im2col_kernel(%arg0: i32, %arg1: i32, %arg2: memref<1x18x18x4xf32, #tpu.memory_space<vmem>>, %arg3: memref<36x128xf32, #tpu.memory_space<vmem>>, %arg4: memref<1x128xf32, #tpu.memory_space<vmem>>, %arg5: memref<1x64x128xf32, #tpu.memory_space<vmem>>, %arg6: memref<64x36xf32, #tpu.memory_space<vmem>>) attributes {dimension_semantics = [#tpu.dimension_semantics<parallel>, #tpu.dimension_semantics<parallel>], iteration_bounds = array<i64: 2, 4>, scalar_prefetch = 0 : i64, scratch_operands = 1 : i64, tpu.core_type = #tpu.core_type<tc>, window_params = [{transform_indices = @transform_0, window_bounds = array<i64: 1, 18, 18, 4>}, {pipeline_mode = #tpu.pipeline_mode<synchronous>, transform_indices = @transform_1, window_bounds = array<i64: 36, 128>}, {pipeline_mode = #tpu.pipeline_mode<synchronous>, transform_indices = @transform_2, window_bounds = array<i64: 1, 128>}, {transform_indices = @transform_3, window_bounds = array<i64: 1, 64, 128>}]} {
    %c4_i32 = arith.constant 4 : i32
    %0 = arith.muli %arg1, %c4_i32 : i32
    %1 = tpu.assume_multiple %0, 4 : i32
    %c0_i32 = arith.constant 0 : i32
    %2 = arith.addi %1, %c0_i32 : i32
    %c0 = arith.constant 0 : index
    %3 = arith.index_cast %2 : i32 to index
    %c0_0 = arith.constant 0 : index
    %c0_1 = arith.constant 0 : index
    %4 = vector.load %arg2[%c0, %3, %c0_0, %c0_1] : memref<1x18x18x4xf32, #tpu.memory_space<vmem>>, vector<1x4x16x4xf32>
    %5 = vector.shape_cast %4 : vector<1x4x16x4xf32> to vector<4x16x4xf32>
    %6 = vector.shape_cast %5 : vector<4x16x4xf32> to vector<64x4xf32>
    %c0_2 = arith.constant 0 : index
    %c0_3 = arith.constant 0 : index
    %7 = vector.load %arg6[%c0_2, %c0_3] : memref<64x36xf32, #tpu.memory_space<vmem>>, vector<64x4xf32>
    tpu.vector_store %arg6[%c0_2, %c0_3], %6 {strides = array<i32>} : memref<64x36xf32, #tpu.memory_space<vmem>>, vector<64x4xf32>,
    %c0_i32_4 = arith.constant 0 : i32
    %8 = arith.addi %1, %c0_i32_4 : i32
    %c0_5 = arith.constant 0 : index
    %9 = arith.index_cast %8 : i32 to index
    %c1 = arith.constant 1 : index
    %c0_6 = arith.constant 0 : index
    %10 = vector.load %arg2[%c0_5, %9, %c1, %c0_6] : memref<1x18x18x4xf32, #tpu.memory_space<vmem>>, vector<1x4x16x4xf32>
    %11 = vector.shape_cast %10 : vector<1x4x16x4xf32> to vector<4x16x4xf32>
    %12 = vector.shape_cast %11 : vector<4x16x4xf32> to vector<64x4xf32>
    %c0_7 = arith.constant 0 : index
    %c4 = arith.constant 4 : index
    %13 = vector.load %arg6[%c0_7, %c4] : memref<64x36xf32, #tpu.memory_space<vmem>>, vector<64x4xf32>
    tpu.vector_store %arg6[%c0_7, %c4], %12 {strides = array<i32>} : memref<64x36xf32, #tpu.memory_space<vmem>>, vector<64x4xf32>,
    %c0_i32_8 = arith.constant 0 : i32
    %14 = arith.addi %1, %c0_i32_8 : i32
    %c0_9 = arith.constant 0 : index
    %15 = arith.index_cast %14 : i32 to index
    %c2 = arith.constant 2 : index
    %c0_10 = arith.constant 0 : index
    %16 = vector.load %arg2[%c0_9, %15, %c2, %c0_10] : memref<1x18x18x4xf32, #tpu.memory_space<vmem>>, vector<1x4x16x4xf32>
    %17 = vector.shape_cast %16 : vector<1x4x16x4xf32> to vector<4x16x4xf32>
    %18 = vector.shape_cast %17 : vector<4x16x4xf32> to vector<64x4xf32>
    %c0_11 = arith.constant 0 : index
    %c8 = arith.constant 8 : index
    %19 = vector.load %arg6[%c0_11, %c8] : memref<64x36xf32, #tpu.memory_space<vmem>>, vector<64x4xf32>
    tpu.vector_store %arg6[%c0_11, %c8], %18 {strides = array<i32>} : memref<64x36xf32, #tpu.memory_space<vmem>>, vector<64x4xf32>,
    %c1_i32 = arith.constant 1 : i32
    %20 = arith.addi %1, %c1_i32 : i32
    %c0_12 = arith.constant 0 : index
    %21 = arith.index_cast %20 : i32 to index
    %c0_13 = arith.constant 0 : index
    %c0_14 = arith.constant 0 : index
    %22 = vector.load %arg2[%c0_12, %21, %c0_13, %c0_14] : memref<1x18x18x4xf32, #tpu.memory_space<vmem>>, vector<1x4x16x4xf32>
    %23 = vector.shape_cast %22 : vector<1x4x16x4xf32> to vector<4x16x4xf32>
    %24 = vector.shape_cast %23 : vector<4x16x4xf32> to vector<64x4xf32>
    %c0_15 = arith.constant 0 : index
    %c12 = arith.constant 12 : index
    %25 = vector.load %arg6[%c0_15, %c12] : memref<64x36xf32, #tpu.memory_space<vmem>>, vector<64x4xf32>
    tpu.vector_store %arg6[%c0_15, %c12], %24 {strides = array<i32>} : memref<64x36xf32, #tpu.memory_space<vmem>>, vector<64x4xf32>,
    %c1_i32_16 = arith.constant 1 : i32
    %26 = arith.addi %1, %c1_i32_16 : i32
    %c0_17 = arith.constant 0 : index
    %27 = arith.index_cast %26 : i32 to index
    %c1_18 = arith.constant 1 : index
    %c0_19 = arith.constant 0 : index
    %28 = vector.load %arg2[%c0_17, %27, %c1_18, %c0_19] : memref<1x18x18x4xf32, #tpu.memory_space<vmem>>, vector<1x4x16x4xf32>
    %29 = vector.shape_cast %28 : vector<1x4x16x4xf32> to vector<4x16x4xf32>
    %30 = vector.shape_cast %29 : vector<4x16x4xf32> to vector<64x4xf32>
    %c0_20 = arith.constant 0 : index
    %c16 = arith.constant 16 : index
    %31 = vector.load %arg6[%c0_20, %c16] : memref<64x36xf32, #tpu.memory_space<vmem>>, vector<64x4xf32>
    tpu.vector_store %arg6[%c0_20, %c16], %30 {strides = array<i32>} : memref<64x36xf32, #tpu.memory_space<vmem>>, vector<64x4xf32>,
    %c1_i32_21 = arith.constant 1 : i32
    %32 = arith.addi %1, %c1_i32_21 : i32
    %c0_22 = arith.constant 0 : index
    %33 = arith.index_cast %32 : i32 to index
    %c2_23 = arith.constant 2 : index
    %c0_24 = arith.constant 0 : index
    %34 = vector.load %arg2[%c0_22, %33, %c2_23, %c0_24] : memref<1x18x18x4xf32, #tpu.memory_space<vmem>>, vector<1x4x16x4xf32>
    %35 = vector.shape_cast %34 : vector<1x4x16x4xf32> to vector<4x16x4xf32>
    %36 = vector.shape_cast %35 : vector<4x16x4xf32> to vector<64x4xf32>
    %c0_25 = arith.constant 0 : index
    %c20 = arith.constant 20 : index
    %37 = vector.load %arg6[%c0_25, %c20] : memref<64x36xf32, #tpu.memory_space<vmem>>, vector<64x4xf32>
    tpu.vector_store %arg6[%c0_25, %c20], %36 {strides = array<i32>} : memref<64x36xf32, #tpu.memory_space<vmem>>, vector<64x4xf32>,
    %c2_i32 = arith.constant 2 : i32
    %38 = arith.addi %1, %c2_i32 : i32
    %c0_26 = arith.constant 0 : index
    %39 = arith.index_cast %38 : i32 to index
    %c0_27 = arith.constant 0 : index
    %c0_28 = arith.constant 0 : index
    %40 = vector.load %arg2[%c0_26, %39, %c0_27, %c0_28] : memref<1x18x18x4xf32, #tpu.memory_space<vmem>>, vector<1x4x16x4xf32>
    %41 = vector.shape_cast %40 : vector<1x4x16x4xf32> to vector<4x16x4xf32>
    %42 = vector.shape_cast %41 : vector<4x16x4xf32> to vector<64x4xf32>
    %c0_29 = arith.constant 0 : index
    %c24 = arith.constant 24 : index
    %43 = vector.load %arg6[%c0_29, %c24] : memref<64x36xf32, #tpu.memory_space<vmem>>, vector<64x4xf32>
    tpu.vector_store %arg6[%c0_29, %c24], %42 {strides = array<i32>} : memref<64x36xf32, #tpu.memory_space<vmem>>, vector<64x4xf32>,
    %c2_i32_30 = arith.constant 2 : i32
    %44 = arith.addi %1, %c2_i32_30 : i32
    %c0_31 = arith.constant 0 : index
    %45 = arith.index_cast %44 : i32 to index
    %c1_32 = arith.constant 1 : index
    %c0_33 = arith.constant 0 : index
    %46 = vector.load %arg2[%c0_31, %45, %c1_32, %c0_33] : memref<1x18x18x4xf32, #tpu.memory_space<vmem>>, vector<1x4x16x4xf32>
    %47 = vector.shape_cast %46 : vector<1x4x16x4xf32> to vector<4x16x4xf32>
    %48 = vector.shape_cast %47 : vector<4x16x4xf32> to vector<64x4xf32>
    %c0_34 = arith.constant 0 : index
    %c28 = arith.constant 28 : index
    %49 = vector.load %arg6[%c0_34, %c28] : memref<64x36xf32, #tpu.memory_space<vmem>>, vector<64x4xf32>
    tpu.vector_store %arg6[%c0_34, %c28], %48 {strides = array<i32>} : memref<64x36xf32, #tpu.memory_space<vmem>>, vector<64x4xf32>,
    %c2_i32_35 = arith.constant 2 : i32
    %50 = arith.addi %1, %c2_i32_35 : i32
    %c0_36 = arith.constant 0 : index
    %51 = arith.index_cast %50 : i32 to index
    %c2_37 = arith.constant 2 : index
    %c0_38 = arith.constant 0 : index
    %52 = vector.load %arg2[%c0_36, %51, %c2_37, %c0_38] : memref<1x18x18x4xf32, #tpu.memory_space<vmem>>, vector<1x4x16x4xf32>
    %53 = vector.shape_cast %52 : vector<1x4x16x4xf32> to vector<4x16x4xf32>
    %54 = vector.shape_cast %53 : vector<4x16x4xf32> to vector<64x4xf32>
    %c0_39 = arith.constant 0 : index
    %c32 = arith.constant 32 : index
    %55 = vector.load %arg6[%c0_39, %c32] : memref<64x36xf32, #tpu.memory_space<vmem>>, vector<64x4xf32>
    tpu.vector_store %arg6[%c0_39, %c32], %54 {strides = array<i32>} : memref<64x36xf32, #tpu.memory_space<vmem>>, vector<64x4xf32>,
    %c0_40 = arith.constant 0 : index
    %c0_41 = arith.constant 0 : index
    %56 = vector.load %arg6[%c0_40, %c0_41] : memref<64x36xf32, #tpu.memory_space<vmem>>, vector<64x36xf32>
    %c0_42 = arith.constant 0 : index
    %c0_43 = arith.constant 0 : index
    %57 = vector.load %arg3[%c0_42, %c0_43] : memref<36x128xf32, #tpu.memory_space<vmem>>, vector<36x128xf32>
    %cst = arith.constant dense<0.000000e+00> : vector<64x128xf32>
    %58 = tpu.matmul %56, %57, %cst {dimension_numbers = #tpu.dot_dimension_numbers<[1], [0], [0], [1], [0, 0, 1, 1], [], []>} : vector<64x36xf32>, vector<36x128xf32>, vector<64x128xf32> -> vector<64x128xf32>
    %c0_44 = arith.constant 0 : index
    %c0_45 = arith.constant 0 : index
    %59 = vector.load %arg4[%c0_44, %c0_45] : memref<1x128xf32, #tpu.memory_space<vmem>>, vector<1x128xf32>
    %60 = vector.broadcast %59 : vector<1x128xf32> to vector<64x128xf32>
    %61 = arith.addf %58, %60 : vector<64x128xf32>
    %c0_46 = arith.constant 0 : index
    %c0_47 = arith.constant 0 : index
    %c0_48 = arith.constant 0 : index
    %62 = vector.load %arg5[%c0_46, %c0_47, %c0_48] : memref<1x64x128xf32, #tpu.memory_space<vmem>>, vector<1x64x128xf32>
    %63 = vector.shape_cast %62 : vector<1x64x128xf32> to vector<64x128xf32>
    %64 = vector.shape_cast %61 : vector<64x128xf32> to vector<1x64x128xf32>
    tpu.vector_store %arg5[%c0_46, %c0_47, %c0_48], %64 {strides = array<i32>} : memref<1x64x128xf32, #tpu.memory_space<vmem>>, vector<1x64x128xf32>,
    return
  }
  func.func @transform_0(%arg0: i32, %arg1: i32) -> (i32, i32, i32, i32) {
    %c0_i32 = arith.constant 0 : i32
    %c0_i32_0 = arith.constant 0 : i32
    %c0_i32_1 = arith.constant 0 : i32
    %c0_i32_2 = arith.constant 0 : i32
    return %arg0, %c0_i32, %c0_i32_0, %c0_i32_1 : i32, i32, i32, i32
  }
  func.func @transform_1(%arg0: i32, %arg1: i32) -> (i32, i32) {
    %c0_i32 = arith.constant 0 : i32
    %c0_i32_0 = arith.constant 0 : i32
    %c0_i32_1 = arith.constant 0 : i32
    return %c0_i32, %c0_i32_0 : i32, i32
  }
  func.func @transform_2(%arg0: i32, %arg1: i32) -> (i32, i32) {
    %c0_i32 = arith.constant 0 : i32
    %c0_i32_0 = arith.constant 0 : i32
    %c0_i32_1 = arith.constant 0 : i32
    return %c0_i32, %c0_i32_0 : i32, i32
  }
  func.func @transform_3(%arg0: i32, %arg1: i32) -> (i32, i32, i32) {
    %c0_i32 = arith.constant 0 : i32
    %c0_i32_0 = arith.constant 0 : i32
    return %arg0, %arg1, %c0_i32 : i32, i32, i32
  }
}

</mosaic_0001>

<llo_original>
// kernel: tpu_custom_call.1
$region0: #{tpu_custom_call.1}
  #allocation0 [shape = 'u32[]', space=smem, size = 0x4, offset = 0x4, fixed_abs, tag = 'smem constant byte address 0x4 - core index']
  #allocation1 [shape = 'u32[144,128]{1,0:T(1,128)}', space=vmem, size = 0x12000, scoped, tag = 'internal scratch']
  #allocation2 [shape = 'f32[64,36]{1,0:T(8,128)}', space=vmem, size = 0x8000, scoped, tag = 'scratch operand']
  %s0 = inlined_call_operand.vmem [shape: f32[2,18,18,4], index: 0, kind: input, shape index: {}]
  %s1 = inlined_call_operand.vmem [shape: f32[36,128], index: 1, kind: input, shape index: {}]
  %s2 = inlined_call_operand.vmem [shape: f32[1,128], index: 2, kind: input, shape index: {}]
  %s3 = inlined_call_operand.hbm [shape: f32[2,256,128], index: 3, kind: output, shape index: {}]
  %s4 = sld [smem:[#allocation0]]
  $region45: #{tpu_custom_call.1} parent=0
    _
  %s6 = ssub.s32 1, %s4
  %s7 = scalar_select 0, %s6, %s4
  $region1: #{tpu_custom_call.1} parent=0
    #allocation3 [shape = 'u8[65536]{0}', space=vmem, size = 0x10000, scoped, tag = 'output window, operand 0']
    #allocation4 [shape = 's32[2]{0}', space=sflag, size = 0x8, scoped, tag = 'scoped memory for tpu_custom_call.1']
    %8 = vsyncpa [#allocation4], 0
    %s9 = scalar_lea.sflag [#allocation4], 1
    %10 = vsyncpa %s9, 0
    loop: start=0, step=1, limit=10
    $region2: #{tpu_custom_call.1} parent=1 // loop_pre_header
      _
    $region3: #{tpu_custom_call.1} parent=1 // loop_header
      %s12 = sphi 0, %s16
      %p13 = scmp.ge.s32.totalorder %s12, 10
      %s19 = sphi 0, %s31
      %s20 = sphi 0, %s27
      %s21 = sphi 0, %s19
      %s22 = sphi 0, %s20
      %s23 = sphi 0, %s21
      %s24 = sphi 0, %s22
      %s34 = sphi 0, %s36
      %s37 = sphi 0, %s34
      %s38 = sphi 0, %s37
      %s54 = sphi 0, %s38
      %s58 = sphi 0, %s58
      %s60 = sphi 0, %s58
      %s61 = sphi 0, %s60
      %s75 = sphi 0, %s61
      %s79 = sphi 0, %s79
      %s81 = sphi 0, %s79
      %s82 = sphi 0, %s81
      %s96 = sphi 0, %s82
      %s104 = sphi 0, %s106
      %s107 = sphi 0, %s104
      %s108 = sphi 0, %s107
      %s124 = sphi 0, %s108
    $region4: #{tpu_custom_call.1} parent=1 // loop_header_branch
      %15 = sbr.rel (%p13) target = $region8
    $region5: #{tpu_custom_call.1} parent=1 // loop_body
      %s17 = ssub.s32 %s12, 1
      %s18 = ssub.s32 %s12, 2
      %s25 = sadd.s32 1, %s20
      %p26 = scmp.ge.s32.totalorder %s25, 4
      %s27 = scalar_select %p26, 0, %s25
      %s28 = sadd.s32 1, %s19
      %s29 = scalar_select %p26, %s28, %s19
      %p30 = scmp.ge.s32.totalorder %s29, 2
      %s31 = scalar_select %p30, 0, %s29
      %s32 = ssub.s32 %s19, %s31
      %p33 = scmp.eq.s32.totalorder %s32, 0
      %s35 = sadd.s32 %s34, 1
      %s36 = scalar_select %p33, %s34, %s35
      %p39 = pneg %p33
      %p40 = scmp.eq.s32.totalorder %s12, 7
      %p41 = por %p39, %p40
      %p42 = scmp.ne.s32.totalorder %s34, %s37
      %p43 = scmp.eq.s32.totalorder %s12, 0
      %p44 = por %p42, %p43
      %p45 = scmp.ne.s32.totalorder %s34, %s37
      %p46 = scmp.eq.s32.totalorder %s17, 7
      %p47 = por %p45, %p46
      %p48 = scmp.ne.s32.totalorder %s37, %s38
      %p49 = scmp.eq.s32.totalorder %s17, 0
      %p50 = por %p48, %p49
      %p51 = scmp.ne.s32.totalorder %s37, %s38
      %p52 = scmp.eq.s32.totalorder %s18, 7
      %p53 = por %p51, %p52
      %p55 = scmp.ne.s32.totalorder %s38, %s54
      %p56 = scmp.eq.s32.totalorder %s18, 0
      %p57 = por %p55, %p56
      %s59 = sadd.s32 %s58, 1
      %p62 = scmp.eq.s32.totalorder %s12, 7
      %p63 = scmp.ne.s32.totalorder %s58, %s60
      %p64 = scmp.eq.s32.totalorder %s12, 0
      %p65 = por %p63, %p64
      %p66 = scmp.ne.s32.totalorder %s58, %s60
      %p67 = scmp.eq.s32.totalorder %s17, 7
      %p68 = por %p66, %p67
      %p69 = scmp.ne.s32.totalorder %s60, %s61
      %p70 = scmp.eq.s32.totalorder %s17, 0
      %p71 = por %p69, %p70
      %p72 = scmp.ne.s32.totalorder %s60, %s61
      %p73 = scmp.eq.s32.totalorder %s18, 7
      %p74 = por %p72, %p73
      %p76 = scmp.ne.s32.totalorder %s61, %s75
      %p77 = scmp.eq.s32.totalorder %s18, 0
      %p78 = por %p76, %p77
      %s80 = sadd.s32 %s79, 1
      %p83 = scmp.eq.s32.totalorder %s12, 7
      %p84 = scmp.ne.s32.totalorder %s79, %s81
      %p85 = scmp.eq.s32.totalorder %s12, 0
      %p86 = por %p84, %p85
      %p87 = scmp.ne.s32.totalorder %s79, %s81
      %p88 = scmp.eq.s32.totalorder %s17, 7
      %p89 = por %p87, %p88
      %p90 = scmp.ne.s32.totalorder %s81, %s82
      %p91 = scmp.eq.s32.totalorder %s17, 0
      %p92 = por %p90, %p91
      %p93 = scmp.ne.s32.totalorder %s81, %s82
      %p94 = scmp.eq.s32.totalorder %s18, 7
      %p95 = por %p93, %p94
      %p97 = scmp.ne.s32.totalorder %s82, %s96
      %p98 = scmp.eq.s32.totalorder %s18, 0
      %p99 = por %p97, %p98
      %s100 = ssub.s32 %s19, %s31
      %s101 = ssub.s32 %s20, %s27
      %s102 = sor.u32 %s100, %s101
      %p103 = scmp.eq.s32.totalorder %s102, 0
      %s105 = sadd.s32 %s104, 1
      %s106 = scalar_select %p103, %s104, %s105
      %p109 = pneg %p103
      %p110 = scmp.eq.s32.totalorder %s12, 7
      %p111 = por %p109, %p110
      %p112 = scmp.ne.s32.totalorder %s104, %s107
      %p113 = scmp.eq.s32.totalorder %s12, 0
      %p114 = por %p112, %p113
      %p115 = scmp.ne.s32.totalorder %s104, %s107
      %p116 = scmp.eq.s32.totalorder %s17, 7
      %p117 = por %p115, %p116
      %p118 = scmp.ne.s32.totalorder %s107, %s108
      %p119 = scmp.eq.s32.totalorder %s17, 0
      %p120 = por %p118, %p119
      %p121 = scmp.ne.s32.totalorder %s107, %s108
      %p122 = scmp.eq.s32.totalorder %s18, 7
      %p123 = por %p121, %p122
      %p125 = scmp.ne.s32.totalorder %s108, %s124
      %p126 = scmp.eq.s32.totalorder %s18, 0
      %p127 = por %p125, %p126
      %p128 = scmp.le.s32.totalorder 1, %s12
      %p129 = scmp.lt.s32.totalorder %s12, 9
      %p130 = pnand %p128, %p129
      %p131 = pneg %p130
      // Predicated region
      $region9: #{tpu_custom_call.1} parent=5 // pred_check
        _
      $region10: #{tpu_custom_call.1} parent=5 // pred_check_branch
        %133 = sbr.rel (%p130) target = $region12
      $region11: #{tpu_custom_call.1} parent=5 // pred_region
        %s134 = ssub.s32 %s12, 1
        // Predicated region
        $region13: #{tpu_custom_call.1} parent=11 // pred_check
          %p135 = pneg %p71
        $region14: #{tpu_custom_call.1} parent=11 // pred_check_branch
          %137 = sbr.rel (%p135) target = $region16
        $region15: #{tpu_custom_call.1} parent=11 // pred_region
          _
        $region16: #{tpu_custom_call.1} parent=11 // pred_fallthru
          _
        // Predicated region
        $region17: #{tpu_custom_call.1} parent=11 // pred_check
          %p138 = pneg %p92
        $region18: #{tpu_custom_call.1} parent=11 // pred_check_branch
          %140 = sbr.rel (%p138) target = $region20
        $region19: #{tpu_custom_call.1} parent=11 // pred_region
          _
        $region20: #{tpu_custom_call.1} parent=11 // pred_fallthru
          _
      $region12: #{tpu_custom_call.1} parent=5 // pred_fallthru
        _
      %p141 = scmp.lt.s32.totalorder %s12, 8
      // Predicated region
      $region21: #{tpu_custom_call.1} parent=5 // pred_check
        %p142 = pneg %p141
      $region22: #{tpu_custom_call.1} parent=5 // pred_check_branch
        %144 = sbr.rel (%p142) target = $region24
      $region23: #{tpu_custom_call.1} parent=5 // pred_region
        // Predicated region
        $region25: #{tpu_custom_call.1} parent=23 // pred_check
          %p145 = pneg %p44
        $region26: #{tpu_custom_call.1} parent=23 // pred_check_branch
          %147 = sbr.rel (%p145) target = $region28
        $region27: #{tpu_custom_call.1} parent=23 // pred_region
          %p148 = scmp.lt.s32.totalorder %s19, 1
          %s149 = scalar_select %p148, %s19, 1
          %s150 = smul.addr %s149, 54
          %s151 = smul.addr %s150, 8
          %s152 = scalar_lea.vmem %s0, %s151
        $region28: #{tpu_custom_call.1} parent=23 // pred_fallthru
          _
      $region24: #{tpu_custom_call.1} parent=5 // pred_fallthru
        _
      %p153 = scmp.le.s32.totalorder 1, %s12
      %p154 = scmp.lt.s32.totalorder %s12, 9
      %p155 = pnand %p153, %p154
      %p156 = pneg %p155
      // Predicated region
      $region29: #{tpu_custom_call.1} parent=5 // pred_check
        _
      $region30: #{tpu_custom_call.1} parent=5 // pred_check_branch
        %158 = sbr.rel (%p155) target = $region32
      $region31: #{tpu_custom_call.1} parent=5 // pred_region
        %s159 = ssub.s32 %s12, 1
        %p160 = scmp.lt.s32.totalorder %s21, 1
        %s161 = scalar_select %p160, %s21, 1
        %s162 = smul.addr %s161, 54
        %s163 = smul.addr %s162, 8
        %s164 = scalar_lea.vmem %s0, %s163
        %p165 = pneg %p50
        %p166 = pneg %p47
        %p167 = pneg %p71
        %p168 = pneg %p68
        %p169 = pneg %p92
        %p170 = pneg %p89
        %p171 = pneg %p120
        %p172 = pneg %p117
        %s173 = sand.u32 %s107, 1
        %s174 = scalar_lea.sflag [#allocation4], %s173
        %s175 = sand.u32 %s107, 1
        %s176 = smul.addr %s175, 64
        %s177 = scalar_lea.vmem [#allocation3], %s176
        %p178 = scmp.lt.s32.totalorder %s21, 1
        %s179 = scalar_select %p178, %s21, 1
        %s180 = smul.addr %s179, 54
        %s181 = smul.addr %s180, 8
        %s182 = scalar_lea.vmem %s0, %s181
        %s183 = smul.u32 8, %s22
        %s184 = smul.u32 %s22, 4
        %s185 = smul.u32 %s184, 24
        %s186 = scalar_lea.vmem %s182, %s185
        %v187 = vld [vmem:[%s186] sm:$0xff]
        %v188 = vld [vmem:[%s186 + $0x8] sm:$0xff]
        %v189 = vld [vmem:[%s186 + $0x18] sm:$0xff]
        %v190 = vld [vmem:[%s186 + $0x20] sm:$0xff]
        %v191 = vld [vmem:[%s186 + $0x30] sm:$0xff]
        %v192 = vld [vmem:[%s186 + $0x38] sm:$0xff]
        %v193 = vld [vmem:[%s186 + $0x48] sm:$0xff]
        %v194 = vld [vmem:[%s186 + $0x50] sm:$0xff]
        %vm195 = vcmask 31744
        %196 = vst.msk [vmem:[#allocation2] sm:$0xff] %vm195, %v187
        %197 = vst.msk [vmem:[#allocation2 + $0x8] sm:$0xff] %vm195, %v188
        %198 = vst.msk [vmem:[#allocation2 + $0x10] sm:$0xff] %vm195, %v189
        %199 = vst.msk [vmem:[#allocation2 + $0x18] sm:$0xff] %vm195, %v190
        %200 = vst.msk [vmem:[#allocation2 + $0x20] sm:$0xff] %vm195, %v191
        %201 = vst.msk [vmem:[#allocation2 + $0x28] sm:$0xff] %vm195, %v192
        %202 = vst.msk [vmem:[#allocation2 + $0x30] sm:$0xff] %vm195, %v193
        %203 = vst.msk [vmem:[#allocation2 + $0x38] sm:$0xff] %vm195, %v194
        %v204 = vld [vmem:[%s186 + $0x1] sm:$0xff]
        %v205 = vld [vmem:[%s186 + $0x9] sm:$0xff]
        %v206 = vld [vmem:[%s186 + $0x19] sm:$0xff]
        %v207 = vld [vmem:[%s186 + $0x21] sm:$0xff]
        %v208 = vld [vmem:[%s186 + $0x31] sm:$0xff]
        %v209 = vld [vmem:[%s186 + $0x39] sm:$0xff]
        %v210 = vld [vmem:[%s186 + $0x49] sm:$0xff]
        %v211 = vld [vmem:[%s186 + $0x51] sm:$0xff]
        %220 = vrot.lane.b32.xlu0 %v204, 4
        %v221 = vpop.permute.xlu0 %220
        %222 = vrot.lane.b32.xlu0 %v205, 4
        %v223 = vpop.permute.xlu0 %222
        %224 = vrot.lane.b32.xlu0 %v206, 4
        %v225 = vpop.permute.xlu0 %224
        %226 = vrot.lane.b32.xlu0 %v207, 4
        %v227 = vpop.permute.xlu0 %226
        %228 = vrot.lane.b32.xlu0 %v208, 4
        %v229 = vpop.permute.xlu0 %228
        %230 = vrot.lane.b32.xlu0 %v209, 4
        %v231 = vpop.permute.xlu0 %230
        %232 = vrot.lane.b32.xlu0 %v210, 4
        %v233 = vpop.permute.xlu0 %232
        %234 = vrot.lane.b32.xlu0 %v211, 4
        %v235 = vpop.permute.xlu0 %234
        %vm244 = vcmask 64544
        %245 = vst.msk [vmem:[#allocation2] sm:$0xff] %vm244, %v221
        %246 = vst.msk [vmem:[#allocation2 + $0x8] sm:$0xff] %vm244, %v223
        %247 = vst.msk [vmem:[#allocation2 + $0x10] sm:$0xff] %vm244, %v225
        %248 = vst.msk [vmem:[#allocation2 + $0x18] sm:$0xff] %vm244, %v227
        %249 = vst.msk [vmem:[#allocation2 + $0x20] sm:$0xff] %vm244, %v229
        %250 = vst.msk [vmem:[#allocation2 + $0x28] sm:$0xff] %vm244, %v231
        %251 = vst.msk [vmem:[#allocation2 + $0x30] sm:$0xff] %vm244, %v233
        %252 = vst.msk [vmem:[#allocation2 + $0x38] sm:$0xff] %vm244, %v235
        %v253 = vld [vmem:[%s186 + $0x2] sm:$0xff]
        %v254 = vld [vmem:[%s186 + $0xa] sm:$0xff]
        %v255 = vld [vmem:[%s186 + $0x1a] sm:$0xff]
        %v256 = vld [vmem:[%s186 + $0x22] sm:$0xff]
        %v257 = vld [vmem:[%s186 + $0x32] sm:$0xff]
        %v258 = vld [vmem:[%s186 + $0x3a] sm:$0xff]
        %v259 = vld [vmem:[%s186 + $0x4a] sm:$0xff]
        %v260 = vld [vmem:[%s186 + $0x52] sm:$0xff]
        %269 = vrot.lane.b32.xlu0 %v253, 8
        %v270 = vpop.permute.xlu0 %269
        %271 = vrot.lane.b32.xlu0 %v254, 8
        %v272 = vpop.permute.xlu0 %271
        %273 = vrot.lane.b32.xlu0 %v255, 8
        %v274 = vpop.permute.xlu0 %273
        %275 = vrot.lane.b32.xlu0 %v256, 8
        %v276 = vpop.permute.xlu0 %275
        %277 = vrot.lane.b32.xlu0 %v257, 8
        %v278 = vpop.permute.xlu0 %277
        %279 = vrot.lane.b32.xlu0 %v258, 8
        %v280 = vpop.permute.xlu0 %279
        %281 = vrot.lane.b32.xlu0 %v259, 8
        %v282 = vpop.permute.xlu0 %281
        %283 = vrot.lane.b32.xlu0 %v260, 8
        %v284 = vpop.permute.xlu0 %283
        %vm293 = vcmask 97344
        %294 = vst.msk [vmem:[#allocation2] sm:$0xff] %vm293, %v270
        %295 = vst.msk [vmem:[#allocation2 + $0x8] sm:$0xff] %vm293, %v272
        %296 = vst.msk [vmem:[#allocation2 + $0x10] sm:$0xff] %vm293, %v274
        %297 = vst.msk [vmem:[#allocation2 + $0x18] sm:$0xff] %vm293, %v276
        %298 = vst.msk [vmem:[#allocation2 + $0x20] sm:$0xff] %vm293, %v278
        %299 = vst.msk [vmem:[#allocation2 + $0x28] sm:$0xff] %vm293, %v280
        %300 = vst.msk [vmem:[#allocation2 + $0x30] sm:$0xff] %vm293, %v282
        %301 = vst.msk [vmem:[#allocation2 + $0x38] sm:$0xff] %vm293, %v284
        %s302 = sadd.s32 %s184, 1
        %s303 = smul.u32 %s302, 24
        %s304 = scalar_lea.vmem %s182, %s303
        %v305 = vld [vmem:[%s304] sm:$0xff]
        %v306 = vld [vmem:[%s304 + $0x8] sm:$0xff]
        %v307 = vld [vmem:[%s304 + $0x18] sm:$0xff]
        %v308 = vld [vmem:[%s304 + $0x20] sm:$0xff]
        %v309 = vld [vmem:[%s304 + $0x30] sm:$0xff]
        %v310 = vld [vmem:[%s304 + $0x38] sm:$0xff]
        %v311 = vld [vmem:[%s304 + $0x48] sm:$0xff]
        %v312 = vld [vmem:[%s304 + $0x50] sm:$0xff]
        %321 = vrot.lane.b32.xlu0 %v305, 12
        %v322 = vpop.permute.xlu0 %321
        %323 = vrot.lane.b32.xlu0 %v306, 12
        %v324 = vpop.permute.xlu0 %323
        %325 = vrot.lane.b32.xlu0 %v307, 12
        %v326 = vpop.permute.xlu0 %325
        %327 = vrot.lane.b32.xlu0 %v308, 12
        %v328 = vpop.permute.xlu0 %327
        %329 = vrot.lane.b32.xlu0 %v309, 12
        %v330 = vpop.permute.xlu0 %329
        %331 = vrot.lane.b32.xlu0 %v310, 12
        %v332 = vpop.permute.xlu0 %331
        %333 = vrot.lane.b32.xlu0 %v311, 12
        %v334 = vpop.permute.xlu0 %333
        %335 = vrot.lane.b32.xlu0 %v312, 12
        %v336 = vpop.permute.xlu0 %335
        %vm345 = vcmask 130144
        %346 = vst.msk [vmem:[#allocation2] sm:$0xff] %vm345, %v322
        %347 = vst.msk [vmem:[#allocation2 + $0x8] sm:$0xff] %vm345, %v324
        %348 = vst.msk [vmem:[#allocation2 + $0x10] sm:$0xff] %vm345, %v326
        %349 = vst.msk [vmem:[#allocation2 + $0x18] sm:$0xff] %vm345, %v328
        %350 = vst.msk [vmem:[#allocation2 + $0x20] sm:$0xff] %vm345, %v330
        %351 = vst.msk [vmem:[#allocation2 + $0x28] sm:$0xff] %vm345, %v332
        %352 = vst.msk [vmem:[#allocation2 + $0x30] sm:$0xff] %vm345, %v334
        %353 = vst.msk [vmem:[#allocation2 + $0x38] sm:$0xff] %vm345, %v336
        %v354 = vld [vmem:[%s304 + $0x1] sm:$0xff]
        %v355 = vld [vmem:[%s304 + $0x9] sm:$0xff]
        %v356 = vld [vmem:[%s304 + $0x19] sm:$0xff]
        %v357 = vld [vmem:[%s304 + $0x21] sm:$0xff]
        %v358 = vld [vmem:[%s304 + $0x31] sm:$0xff]
        %v359 = vld [vmem:[%s304 + $0x39] sm:$0xff]
        %v360 = vld [vmem:[%s304 + $0x49] sm:$0xff]
        %v361 = vld [vmem:[%s304 + $0x51] sm:$0xff]
        %370 = vrot.lane.b32.xlu0 %v354, 16
        %v371 = vpop.permute.xlu0 %370
        %372 = vrot.lane.b32.xlu0 %v355, 16
        %v373 = vpop.permute.xlu0 %372
        %374 = vrot.lane.b32.xlu0 %v356, 16
        %v375 = vpop.permute.xlu0 %374
        %376 = vrot.lane.b32.xlu0 %v357, 16
        %v377 = vpop.permute.xlu0 %376
        %378 = vrot.lane.b32.xlu0 %v358, 16
        %v379 = vpop.permute.xlu0 %378
        %380 = vrot.lane.b32.xlu0 %v359, 16
        %v381 = vpop.permute.xlu0 %380
        %382 = vrot.lane.b32.xlu0 %v360, 16
        %v383 = vpop.permute.xlu0 %382
        %384 = vrot.lane.b32.xlu0 %v361, 16
        %v385 = vpop.permute.xlu0 %384
        %vm394 = vcmask 162944
        %395 = vst.msk [vmem:[#allocation2] sm:$0xff] %vm394, %v371
        %396 = vst.msk [vmem:[#allocation2 + $0x8] sm:$0xff] %vm394, %v373
        %397 = vst.msk [vmem:[#allocation2 + $0x10] sm:$0xff] %vm394, %v375
        %398 = vst.msk [vmem:[#allocation2 + $0x18] sm:$0xff] %vm394, %v377
        %399 = vst.msk [vmem:[#allocation2 + $0x20] sm:$0xff] %vm394, %v379
        %400 = vst.msk [vmem:[#allocation2 + $0x28] sm:$0xff] %vm394, %v381
        %401 = vst.msk [vmem:[#allocation2 + $0x30] sm:$0xff] %vm394, %v383
        %402 = vst.msk [vmem:[#allocation2 + $0x38] sm:$0xff] %vm394, %v385
        %v403 = vld [vmem:[%s304 + $0x2] sm:$0xff]
        %v404 = vld [vmem:[%s304 + $0xa] sm:$0xff]
        %v405 = vld [vmem:[%s304 + $0x1a] sm:$0xff]
        %v406 = vld [vmem:[%s304 + $0x22] sm:$0xff]
        %v407 = vld [vmem:[%s304 + $0x32] sm:$0xff]
        %v408 = vld [vmem:[%s304 + $0x3a] sm:$0xff]
        %v409 = vld [vmem:[%s304 + $0x4a] sm:$0xff]
        %v410 = vld [vmem:[%s304 + $0x52] sm:$0xff]
        %419 = vrot.lane.b32.xlu0 %v403, 20
        %v420 = vpop.permute.xlu0 %419
        %421 = vrot.lane.b32.xlu0 %v404, 20
        %v422 = vpop.permute.xlu0 %421
        %423 = vrot.lane.b32.xlu0 %v405, 20
        %v424 = vpop.permute.xlu0 %423
        %425 = vrot.lane.b32.xlu0 %v406, 20
        %v426 = vpop.permute.xlu0 %425
        %427 = vrot.lane.b32.xlu0 %v407, 20
        %v428 = vpop.permute.xlu0 %427
        %429 = vrot.lane.b32.xlu0 %v408, 20
        %v430 = vpop.permute.xlu0 %429
        %431 = vrot.lane.b32.xlu0 %v409, 20
        %v432 = vpop.permute.xlu0 %431
        %433 = vrot.lane.b32.xlu0 %v410, 20
        %v434 = vpop.permute.xlu0 %433
        %vm443 = vcmask 195744
        %444 = vst.msk [vmem:[#allocation2] sm:$0xff] %vm443, %v420
        %445 = vst.msk [vmem:[#allocation2 + $0x8] sm:$0xff] %vm443, %v422
        %446 = vst.msk [vmem:[#allocation2 + $0x10] sm:$0xff] %vm443, %v424
        %447 = vst.msk [vmem:[#allocation2 + $0x18] sm:$0xff] %vm443, %v426
        %448 = vst.msk [vmem:[#allocation2 + $0x20] sm:$0xff] %vm443, %v428
        %449 = vst.msk [vmem:[#allocation2 + $0x28] sm:$0xff] %vm443, %v430
        %450 = vst.msk [vmem:[#allocation2 + $0x30] sm:$0xff] %vm443, %v432
        %451 = vst.msk [vmem:[#allocation2 + $0x38] sm:$0xff] %vm443, %v434
        %s452 = sadd.s32 %s184, 2
        %s453 = smul.u32 %s452, 24
        %s454 = scalar_lea.vmem %s182, %s453
        %v455 = vld [vmem:[%s454] sm:$0xff]
        %v456 = vld [vmem:[%s454 + $0x8] sm:$0xff]
        %v457 = vld [vmem:[%s454 + $0x18] sm:$0xff]
        %v458 = vld [vmem:[%s454 + $0x20] sm:$0xff]
        %v459 = vld [vmem:[%s454 + $0x30] sm:$0xff]
        %v460 = vld [vmem:[%s454 + $0x38] sm:$0xff]
        %v461 = vld [vmem:[%s454 + $0x48] sm:$0xff]
        %v462 = vld [vmem:[%s454 + $0x50] sm:$0xff]
        %471 = vrot.lane.b32.xlu0 %v455, 24
        %v472 = vpop.permute.xlu0 %471
        %473 = vrot.lane.b32.xlu0 %v456, 24
        %v474 = vpop.permute.xlu0 %473
        %475 = vrot.lane.b32.xlu0 %v457, 24
        %v476 = vpop.permute.xlu0 %475
        %477 = vrot.lane.b32.xlu0 %v458, 24
        %v478 = vpop.permute.xlu0 %477
        %479 = vrot.lane.b32.xlu0 %v459, 24
        %v480 = vpop.permute.xlu0 %479
        %481 = vrot.lane.b32.xlu0 %v460, 24
        %v482 = vpop.permute.xlu0 %481
        %483 = vrot.lane.b32.xlu0 %v461, 24
        %v484 = vpop.permute.xlu0 %483
        %485 = vrot.lane.b32.xlu0 %v462, 24
        %v486 = vpop.permute.xlu0 %485
        %vm495 = vcmask 228544
        %496 = vst.msk [vmem:[#allocation2] sm:$0xff] %vm495, %v472
        %497 = vst.msk [vmem:[#allocation2 + $0x8] sm:$0xff] %vm495, %v474
        %498 = vst.msk [vmem:[#allocation2 + $0x10] sm:$0xff] %vm495, %v476
        %499 = vst.msk [vmem:[#allocation2 + $0x18] sm:$0xff] %vm495, %v478
        %500 = vst.msk [vmem:[#allocation2 + $0x20] sm:$0xff] %vm495, %v480
        %501 = vst.msk [vmem:[#allocation2 + $0x28] sm:$0xff] %vm495, %v482
        %502 = vst.msk [vmem:[#allocation2 + $0x30] sm:$0xff] %vm495, %v484
        %503 = vst.msk [vmem:[#allocation2 + $0x38] sm:$0xff] %vm495, %v486
        %v504 = vld [vmem:[%s454 + $0x1] sm:$0xff]
        %v505 = vld [vmem:[%s454 + $0x9] sm:$0xff]
        %v506 = vld [vmem:[%s454 + $0x19] sm:$0xff]
        %v507 = vld [vmem:[%s454 + $0x21] sm:$0xff]
        %v508 = vld [vmem:[%s454 + $0x31] sm:$0xff]
        %v509 = vld [vmem:[%s454 + $0x39] sm:$0xff]
        %v510 = vld [vmem:[%s454 + $0x49] sm:$0xff]
        %v511 = vld [vmem:[%s454 + $0x51] sm:$0xff]
        %520 = vrot.lane.b32.xlu0 %v504, 28
        %v521 = vpop.permute.xlu0 %520
        %522 = vrot.lane.b32.xlu0 %v505, 28
        %v523 = vpop.permute.xlu0 %522
        %524 = vrot.lane.b32.xlu0 %v506, 28
        %v525 = vpop.permute.xlu0 %524
        %526 = vrot.lane.b32.xlu0 %v507, 28
        %v527 = vpop.permute.xlu0 %526
        %528 = vrot.lane.b32.xlu0 %v508, 28
        %v529 = vpop.permute.xlu0 %528
        %530 = vrot.lane.b32.xlu0 %v509, 28
        %v531 = vpop.permute.xlu0 %530
        %532 = vrot.lane.b32.xlu0 %v510, 28
        %v533 = vpop.permute.xlu0 %532
        %534 = vrot.lane.b32.xlu0 %v511, 28
        %v535 = vpop.permute.xlu0 %534
        %vm544 = vcmask 261344
        %545 = vst.msk [vmem:[#allocation2] sm:$0xff] %vm544, %v521
        %546 = vst.msk [vmem:[#allocation2 + $0x8] sm:$0xff] %vm544, %v523
        %547 = vst.msk [vmem:[#allocation2 + $0x10] sm:$0xff] %vm544, %v525
        %548 = vst.msk [vmem:[#allocation2 + $0x18] sm:$0xff] %vm544, %v527
        %549 = vst.msk [vmem:[#allocation2 + $0x20] sm:$0xff] %vm544, %v529
        %550 = vst.msk [vmem:[#allocation2 + $0x28] sm:$0xff] %vm544, %v531
        %551 = vst.msk [vmem:[#allocation2 + $0x30] sm:$0xff] %vm544, %v533
        %552 = vst.msk [vmem:[#allocation2 + $0x38] sm:$0xff] %vm544, %v535
        %v553 = vld [vmem:[%s454 + $0x2] sm:$0xff]
        %v554 = vld [vmem:[%s454 + $0xa] sm:$0xff]
        %v555 = vld [vmem:[%s454 + $0x1a] sm:$0xff]
        %v556 = vld [vmem:[%s454 + $0x22] sm:$0xff]
        %v557 = vld [vmem:[%s454 + $0x32] sm:$0xff]
        %v558 = vld [vmem:[%s454 + $0x3a] sm:$0xff]
        %v559 = vld [vmem:[%s454 + $0x4a] sm:$0xff]
        %v560 = vld [vmem:[%s454 + $0x52] sm:$0xff]
        %569 = vrot.lane.b32.xlu0 %v553, 32
        %v570 = vpop.permute.xlu0 %569
        %571 = vrot.lane.b32.xlu0 %v554, 32
        %v572 = vpop.permute.xlu0 %571
        %573 = vrot.lane.b32.xlu0 %v555, 32
        %v574 = vpop.permute.xlu0 %573
        %575 = vrot.lane.b32.xlu0 %v556, 32
        %v576 = vpop.permute.xlu0 %575
        %577 = vrot.lane.b32.xlu0 %v557, 32
        %v578 = vpop.permute.xlu0 %577
        %579 = vrot.lane.b32.xlu0 %v558, 32
        %v580 = vpop.permute.xlu0 %579
        %581 = vrot.lane.b32.xlu0 %v559, 32
        %v582 = vpop.permute.xlu0 %581
        %583 = vrot.lane.b32.xlu0 %v560, 32
        %v584 = vpop.permute.xlu0 %583
        %vm593 = vcmask 294144
        %594 = vst.msk [vmem:[#allocation2] sm:$0xff] %vm593, %v570
        %595 = vst.msk [vmem:[#allocation2 + $0x8] sm:$0xff] %vm593, %v572
        %596 = vst.msk [vmem:[#allocation2 + $0x10] sm:$0xff] %vm593, %v574
        %597 = vst.msk [vmem:[#allocation2 + $0x18] sm:$0xff] %vm593, %v576
        %598 = vst.msk [vmem:[#allocation2 + $0x20] sm:$0xff] %vm593, %v578
        %599 = vst.msk [vmem:[#allocation2 + $0x28] sm:$0xff] %vm593, %v580
        %600 = vst.msk [vmem:[#allocation2 + $0x30] sm:$0xff] %vm593, %v582
        %601 = vst.msk [vmem:[#allocation2 + $0x38] sm:$0xff] %vm593, %v584
        %v602 = vld [vmem:[#allocation2] sm:$0xff]
        %v603 = vld [vmem:[#allocation2 + $0x8] sm:$0xff]
        %v604 = vld [vmem:[#allocation2 + $0x10] sm:$0xff]
        %v605 = vld [vmem:[#allocation2 + $0x18] sm:$0xff]
        %v606 = vld [vmem:[#allocation2 + $0x20] sm:$0xff]
        %v607 = vld [vmem:[#allocation2 + $0x28] sm:$0xff]
        %v608 = vld [vmem:[#allocation2 + $0x30] sm:$0xff]
        %v609 = vld [vmem:[#allocation2 + $0x38] sm:$0xff]
        %v610 = vld [vmem:[%s1] sm:$0xff]
        %v611 = vld [vmem:[%s1 + $0x8] sm:$0xff]
        %v612 = vld [vmem:[%s1 + $0x10] sm:$0xff]
        %v613 = vld [vmem:[%s1 + $0x18] sm:$0xff]
        %v614 = vld [vmem:[%s1 + $0x20] sm:$0xf]
        %v615 = vld [vmem:[%s2] sm:$0x1]
        %v617 = vlaneseq
        %v618 = vshrl.u32 %v617, 7
        %v619 = vsub.s32 0, %v618
        %v620 = vrot.slane %v615, %v619
        %vm622 = vcmask 293888
        %v624 = vsel %vm622, %v602, 0
        %v627 = vsel %vm622, %v603, 0
        %v630 = vsel %vm622, %v604, 0
        %v633 = vsel %vm622, %v605, 0
        %v636 = vsel %vm622, %v606, 0
        %v639 = vsel %vm622, %v607, 0
        %v642 = vsel %vm622, %v608, 0
        %v645 = vsel %vm622, %v609, 0
        %vm647 = vcmask 1043456
        %v649 = vsel %vm647, %v614, 0
        %651 = vmatprep.subr.mxu0 0.0
        %652 = vmatpush1.msra.mxu0 %v610
        %653 = vmatprep.subr.mxu0 0.0
        %654 = vmatpush1.msra.mxu0 %v611
        %655 = vmatprep.subr.mxu0 0.0
        %656 = vmatpush1.msra.mxu0 %v612
        %657 = vmatprep.subr.mxu0 0.0
        %658 = vmatpush1.msra.mxu0 %v613
        %659 = vmatprep.subr.mxu0 0.0
        %660 = vmatpush1.msra.mxu0 %v649
        %661 = vmatprep.subr.mxu0 0.0
        %662 = vmatpush1.msra.mxu0 0.0
        %663 = vmatprep.subr.mxu0 0.0
        %664 = vmatpush1.msra.mxu0 0.0
        %665 = vmatprep.subr.mxu0 0.0
        %666 = vmatpush1.msra.mxu0 0.0
        %667 = vmatprep.subr.mxu0 0.0
        %668 = vmatpush1.msra.mxu0 0.0
        %669 = vmatprep.subr.mxu0 0.0
        %670 = vmatpush1.msra.mxu0 0.0
        %671 = vmatprep.subr.mxu0 0.0
        %672 = vmatpush1.msra.mxu0 0.0
        %673 = vmatprep.subr.mxu0 0.0
        %674 = vmatpush1.msra.mxu0 0.0
        %675 = vmatprep.subr.mxu0 0.0
        %676 = vmatpush1.msra.mxu0 0.0
        %677 = vmatprep.subr.mxu0 0.0
        %678 = vmatpush1.msra.mxu0 0.0
        %679 = vmatprep.subr.mxu0 0.0
        %680 = vmatpush1.msra.mxu0 0.0
        %681 = vmatprep.subr.mxu0 0.0
        %682 = vmatpush1.msra.mxu0 0.0
        %683 = vmatprep.subr.mxu0 0.0
        %684 = vmatpush1.msra.mxu0 0.0
        %685 = vmatprep.subr.mxu0 0.0
        %686 = vmatpush1.msra.mxu0 0.0
        %687 = vmatprep.subr.mxu0 0.0
        %688 = vmatpush1.msra.mxu0 0.0
        %689 = vmatprep.subr.mxu0 0.0
        %690 = vmatpush1.msra.mxu0 0.0
        %691 = vmatprep.subr.mxu0 0.0
        %692 = vmatpush1.msra.mxu0 0.0
        %693 = vmatprep.subr.mxu0 0.0
        %694 = vmatpush1.msra.mxu0 0.0
        %695 = vmatprep.subr.mxu0 0.0
        %696 = vmatpush1.msra.mxu0 0.0
        %697 = vmatprep.subr.mxu0 0.0
        %698 = vmatpush1.msra.mxu0 0.0
        %699 = vmatprep.subr.mxu0 0.0
        %700 = vmatpush1.msra.mxu0 0.0
        %701 = vmatprep.subr.mxu0 0.0
        %702 = vmatpush1.msra.mxu0 0.0
        %703 = vmatprep.subr.mxu0 0.0
        %704 = vmatpush1.msra.mxu0 0.0
        %705 = vmatprep.subr.mxu0 0.0
        %706 = vmatpush1.msra.mxu0 0.0
        %707 = vmatprep.subr.mxu0 0.0
        %708 = vmatpush1.msra.mxu0 0.0
        %709 = vmatprep.subr.mxu0 0.0
        %710 = vmatpush1.msra.mxu0 0.0
        %711 = vmatprep.subr.mxu0 0.0
        %712 = vmatpush1.msra.mxu0 0.0
        %713 = vmatprep.subr.mxu0 0.0
        %714 = vmatpush1.msra.mxu0 0.0
        %715 = vmatprep.mubr.f32.mxu0 0.0
        %716 = vmatmul.mubr.f32.gmra.mrb[0].mxu0 %v624
        %v717 = vpop.f32.mrb[0].mxu0
        %v718 = vadd.f32 %v620, %v717
        %v719 = vpop.f32.mrb[0].mxu0
        %720 = vmatprep.mubr.f32.mxu0 0.0
        %721 = vmatmul.mubr.f32.gmra.mrb[0].mxu0 %v627
        %v722 = vpop.f32.mrb[0].mxu0
        %v723 = vadd.f32 %v620, %v722
        %v724 = vpop.f32.mrb[0].mxu0
        %725 = vmatprep.mubr.f32.mxu0 0.0
        %726 = vmatmul.mubr.f32.gmra.mrb[0].mxu0 %v630
        %v727 = vpop.f32.mrb[0].mxu0
        %v728 = vadd.f32 %v620, %v727
        %v729 = vpop.f32.mrb[0].mxu0
        %730 = vmatprep.mubr.f32.mxu0 0.0
        %731 = vmatmul.mubr.f32.gmra.mrb[0].mxu0 %v633
        %v732 = vpop.f32.mrb[0].mxu0
        %v733 = vadd.f32 %v620, %v732
        %v734 = vpop.f32.mrb[0].mxu0
        %735 = vmatprep.mubr.f32.mxu0 0.0
        %736 = vmatmul.mubr.f32.gmra.mrb[0].mxu0 %v636
        %v737 = vpop.f32.mrb[0].mxu0
        %v738 = vadd.f32 %v620, %v737
        %v739 = vpop.f32.mrb[0].mxu0
        %740 = vmatprep.mubr.f32.mxu0 0.0
        %741 = vmatmul.mubr.f32.gmra.mrb[0].mxu0 %v639
        %v742 = vpop.f32.mrb[0].mxu0
        %v743 = vadd.f32 %v620, %v742
        %v744 = vpop.f32.mrb[0].mxu0
        %745 = vmatprep.mubr.f32.mxu0 0.0
        %746 = vmatmul.mubr.f32.gmra.mrb[0].mxu0 %v642
        %v747 = vpop.f32.mrb[0].mxu0
        %v748 = vadd.f32 %v620, %v747
        %v749 = vpop.f32.mrb[0].mxu0
        %750 = vmatprep.mubr.f32.mxu0 0.0
        %751 = vmatmul.mubr.f32.gmra.mrb[0].mxu0 %v645
        %v752 = vpop.f32.mrb[0].mxu0
        %v753 = vadd.f32 %v620, %v752
        %v754 = vpop.f32.mrb[0].mxu0
        %755 = vdwg.mxu0
        %756 = vst [vmem:[%s177] sm:$0xff] %v718
        %757 = vst [vmem:[%s177 + $0x8] sm:$0xff] %v723
        %758 = vst [vmem:[%s177 + $0x10] sm:$0xff] %v728
        %759 = vst [vmem:[%s177 + $0x18] sm:$0xff] %v733
        %760 = vst [vmem:[%s177 + $0x20] sm:$0xff] %v738
        %761 = vst [vmem:[%s177 + $0x28] sm:$0xff] %v743
        %762 = vst [vmem:[%s177 + $0x30] sm:$0xff] %v748
        %763 = vst [vmem:[%s177 + $0x38] sm:$0xff] %v753
        %s764 = sand.u32 %s107, 1
        %s765 = scalar_lea.sflag [#allocation4], %s764
        %s766 = sand.u32 %s107, 1
        %s767 = smul.addr %s766, 64
        %s768 = scalar_lea.vmem [#allocation3], %s767
        // Predicated region
        $region33: #{tpu_custom_call.1} parent=31 // pred_check
          %p769 = pneg %p117
        $region34: #{tpu_custom_call.1} parent=31 // pred_check_branch
          %771 = sbr.rel (%p769) target = $region36
        $region35: #{tpu_custom_call.1} parent=31 // pred_region
          %s772 = smul.u32 8, %s22
          %s774 = ssub.s32 1024, 1024
          %775 = vsyncadd %s765, %s774
          %s776 = smul.addr %s21, 32
          %s777 = sadd.s32 %s772, %s776
          %s778 = smul.addr %s777, 128
          %s779 = scalar_lea.hbm %s3, %s778
          %s780 = sshll.u32 %s768, 4
          %s781 = int_to_ptr.vmem [resolvable:$true] %s780
          %786 = dma.vmem_to_hbm [thread:$0]  %s781, 1024, %s779, %s765, 128, 128, 8
        $region36: #{tpu_custom_call.1} parent=31 // pred_fallthru
          _
      $region32: #{tpu_custom_call.1} parent=5 // pred_fallthru
        _
      %p787 = scmp.le.s32.totalorder 2, %s12
      // Predicated region
      $region37: #{tpu_custom_call.1} parent=5 // pred_check
        %p788 = pneg %p787
      $region38: #{tpu_custom_call.1} parent=5 // pred_check_branch
        %790 = sbr.rel (%p788) target = $region40
      $region39: #{tpu_custom_call.1} parent=5 // pred_region
        %s791 = ssub.s32 %s12, 2
        // Predicated region
        $region41: #{tpu_custom_call.1} parent=39 // pred_check
          %p792 = pneg %p123
        $region42: #{tpu_custom_call.1} parent=39 // pred_check_branch
          %794 = sbr.rel (%p792) target = $region44
        $region43: #{tpu_custom_call.1} parent=39 // pred_region
          %s795 = sand.u32 %s108, 1
          %s796 = scalar_lea.sflag [#allocation4], %s795
          %s797 = sand.u32 %s108, 1
          %s798 = smul.addr %s797, 64
          %s799 = scalar_lea.vmem [#allocation3], %s798
          %800 = dma.done %s796, 1024
        $region44: #{tpu_custom_call.1} parent=39 // pred_fallthru
          _
      $region40: #{tpu_custom_call.1} parent=5 // pred_fallthru
        _
    $region6: #{tpu_custom_call.1} parent=1 // loop_footer
      %s16 = sadd.s32 1, %s12
    $region7: #{tpu_custom_call.1} parent=1 // loop_footer_branch
      %11 = sbr.rel target = $region3
    $region8: #{tpu_custom_call.1} parent=1 // loop_exit
      _
    %801 = vsyncpa [#allocation4], 1
    %s802 = scalar_lea.sflag [#allocation4], 1
    %803 = vsyncpa %s802, 1

</llo_original>
